<compile_context>
chip_gen: v7x
topology: tpu7x:2x2x1
jax: 0.10.0
libtpu: 0.0.40
codegen_flags: <defaults>
</compile_context>

<pallas_src>
import functools

import jax
import jax.numpy as jnp
from jax.experimental import pallas as pl
from jax.experimental.pallas import tpu as pltpu


def _round_up(x, m):
    return ((x + m - 1) // m) * m


# ----------------------------------------------------------------------------
# Kernel: one batch tile of the fused 3-layer MLP.
#   x_ref : (tile_b, S)  f32   raw (unpadded) input states
#   w_ref : (3, D, D)    bf16  packed, 128-padded weights (layer-major)
#   b_ref : (3, 1, D)    f32   packed, 128-padded biases
#   o_ref : (tile_b, A)  f32   Q-values at exact logical width (tiny store)
# ----------------------------------------------------------------------------
def _dqn_kernel(x_ref, w_ref, b_ref, o_ref):
    s = x_ref.shape[1]   # state_space (e.g. 4)
    a = o_ref.shape[1]   # action_space (e.g. 2)

    x = x_ref[...]       # (tile_b, S) f32

    # ---- Layer 1 on the VPU: the real contraction is only K = S, so do S
    # broadcast multiply-adds instead of an MXU pass. Only rows [0, s) of the
    # padded w1 slab are nonzero, and they are the only rows we touch.
    w1 = w_ref[0].astype(jnp.float32)                 # (D, D) f32
    h = b_ref[0] + x[:, 0:1] * w1[0:1, :]             # (tile_b, D) f32
    for k in range(1, s):                             # static, unrolled (S-1 MACs)
        h = h + x[:, k:k + 1] * w1[k:k + 1, :]
    h = jnp.maximum(h, 0.0)

    # ---- Layer 2: MXU matmul (bf16 inputs, f32 accumulation) + f32 VPU epilogue.
    h = jnp.dot(h.astype(jnp.bfloat16), w_ref[1],
                preferred_element_type=jnp.float32)
    h = jnp.maximum(h + b_ref[1], 0.0)

    # ---- Layer 3: MXU matmul, no activation.
    out = jnp.dot(h.astype(jnp.bfloat16), w_ref[2],
                  preferred_element_type=jnp.float32)
    out = out + b_ref[2]

    # Store only the logical action columns: a-lane masked store (~8 B/row)
    # instead of a 128-wide padded slab, and no wrapper-side slice afterwards.
    o_ref[...] = out[:, :a]


# ----------------------------------------------------------------------------
# Parameter packing: pad every layer to (D, D) / (1, D) with D = 128-multiple
# and stack layer-major so the kernel only needs two block-invariant operands
# (2 HBM->VMEM DMAs total, fetched once and VMEM-resident across grid steps).
# ----------------------------------------------------------------------------
def pack_params(params, state_space, hidden_size, action_space):
    w1, b1, w2, b2, w3, b3 = params
    D = _round_up(max(state_space, hidden_size, action_space, 1), 128)

    def pad_w(w):
        buf = jnp.zeros((D, D), jnp.float32)
        return buf.at[: w.shape[0], : w.shape[1]].set(w)

    def pad_b(b):
        buf = jnp.zeros((1, D), jnp.float32)
        return buf.at[:, : b.shape[1]].set(b)

    w_packed = jnp.stack([pad_w(w1), pad_w(w2), pad_w(w3)]).astype(jnp.bfloat16)
    b_packed = jnp.stack([pad_b(b1), pad_b(b2), pad_b(b3)])  # stays f32
    return w_packed, b_packed


# ----------------------------------------------------------------------------
# Forward wrapper.
# ----------------------------------------------------------------------------
@functools.partial(jax.jit, static_argnames=("action_space", "tile_b"))
def dqn_forward(x, w_packed, b_packed, *, action_space, tile_b=None):
    """Fused DQN forward.

    x        : (batch, state_space) f32, raw/unpadded.
    w_packed : (3, D, D) bf16 packed weights (from pack_params).
    b_packed : (3, 1, D) f32 packed biases.
    returns  : (batch, action_space) f32 Q-values (exact logical shape).

    tile_b=None (default) -> single batch tile, grid=(1,): best on single-TC
    v5e/v6e. On v7x pass tile_b = batch // 2 to shard the parallel batch axis
    across both TensorCores (verify with a trace; at small batch the per-core
    step overhead can exceed the halved compute).
    """
    if x.dtype != jnp.float32:
        x = x.astype(jnp.float32)
    batch, state_space = x.shape
    D = w_packed.shape[-1]

    # Collapse to one tile unless a legal multi-tile split was requested.
    if tile_b is None or tile_b >= batch or batch % tile_b or tile_b % 8:
        tile_b = batch
    grid = (batch // tile_b,)

    return pl.pallas_call(
        _dqn_kernel,
        out_shape=jax.ShapeDtypeStruct((batch, action_space), jnp.float32),
        grid_spec=pl.GridSpec(
            grid=grid,
            in_specs=[
                # raw states, tiled over batch (last dim == array dim, so the
                # narrow (tile_b, S) block is legal without padding)
                pl.BlockSpec((tile_b, state_space), lambda i: (i, 0)),
                # packed weights / biases: constant index_map -> DMA'd once,
                # VMEM-resident for every grid step (no re-DMA).
                pl.BlockSpec((3, D, D), lambda i: (0, 0, 0)),
                pl.BlockSpec((3, 1, D), lambda i: (0, 0, 0)),
            ],
            out_specs=pl.BlockSpec((tile_b, action_space), lambda i: (i, 0)),
        ),
        compiler_params=pltpu.CompilerParams(
            # Megacore sharding on v7x when grid has >1 step; harmless at (1,).
            dimension_semantics=("parallel",),
        ),
    )(x, w_packed, b_packed)


# ----------------------------------------------------------------------------
# Init + references.
# ----------------------------------------------------------------------------
def init_dqn_params(key, state_space, action_space, hidden_size):
    """PyTorch-style uniform init; weights stored as (in, out) so y = x @ W + b."""

    def linear_init(k, fan_in, fan_out):
        k_w, k_b = jax.random.split(k)
        bound = 1.0 / jnp.sqrt(fan_in)
        w = jax.random.uniform(k_w, (fan_in, fan_out), jnp.float32, -bound, bound)
        b = jax.random.uniform(k_b, (1, fan_out), jnp.float32, -bound, bound)
        return w, b

    k1, k2, k3 = jax.random.split(key, 3)
    w1, b1 = linear_init(k1, state_space, hidden_size)
    w2, b2 = linear_init(k2, hidden_size, hidden_size)
    w3, b3 = linear_init(k3, hidden_size, action_space)
    return (w1, b1, w2, b2, w3, b3)


def dqn_reference(x, params, *, mirror_kernel_dtypes=True):
    """Pure-JAX reference.

    mirror_kernel_dtypes=True reproduces the kernel's numeric conventions:
      layer 1: f32 activations x bf16-stored weights (f32 VPU math);
      layers 2-3: bf16 MXU inputs with f32 accumulation.
    mirror_kernel_dtypes=False is the full-f32 PyTorch-equivalent reference.
    """
    w1, b1, w2, b2, w3, b3 = params
    hi = jax.lax.Precision.HIGHEST

    if mirror_kernel_dtypes:
        w1m = w1.astype(jnp.bfloat16).astype(jnp.float32)
        h = jnp.maximum(jnp.dot(x, w1m, precision=hi) + b1, 0.0)
        h = jnp.maximum(
            jnp.dot(h.astype(jnp.bfloat16), w2.astype(jnp.bfloat16),
                    preferred_element_type=jnp.float32) + b2, 0.0)
        return jnp.dot(h.astype(jnp.bfloat16), w3.astype(jnp.bfloat16),
                       preferred_element_type=jnp.float32) + b3

    h = jnp.maximum(jnp.dot(x, w1, precision=hi) + b1, 0.0)
    h = jnp.maximum(jnp.dot(h, w2, precision=hi) + b2, 0.0)
    return jnp.dot(h, w3, precision=hi) + b3


if __name__ == "__main__":
    # CartPole-scale DQN with a small replay-minibatch-sized batch.
    state_space, action_space, hidden_size = 4, 2, 32
    batch = 64

    key = jax.random.PRNGKey(0)
    k_params, k_x = jax.random.split(key)

    params = init_dqn_params(k_params, state_space, action_space, hidden_size)
    x = jax.random.normal(k_x, (batch, state_space), dtype=jnp.float32)

    # Pack once (amortized across all forward calls / training steps).
    w_packed, b_packed = pack_params(params, state_space, hidden_size, action_space)

    ref_kernel_conv = dqn_reference(x, params, mirror_kernel_dtypes=True)
    ref_f32 = dqn_reference(x, params, mirror_kernel_dtypes=False)

    # Default config: single batch tile, grid=(1,)  (v5e / v6e sweet spot).
    out = dqn_forward(x, w_packed, b_packed, action_space=action_space)
    out = jax.block_until_ready(out)
    assert out.shape == (batch, action_space), out.shape
    assert jnp.allclose(out, ref_kernel_conv, atol=2e-3, rtol=2e-3), \
        "mismatch vs kernel-convention reference (single tile)"
    assert jnp.allclose(out, ref_f32, atol=5e-2, rtol=5e-2), \
        "mismatch vs f32 reference (single tile)"

    # v7x-style config: 2 batch tiles on the 'parallel' axis (megacore sharding).
    out2 = dqn_forward(x, w_packed, b_packed, action_space=action_space,
                       tile_b=batch // 2)
    out2 = jax.block_until_ready(out2)
    assert out2.shape == (batch, action_space), out2.shape
    assert jnp.allclose(out2, ref_kernel_conv, atol=2e-3, rtol=2e-3), \
        "mismatch vs kernel-convention reference (2 tiles)"
    assert jnp.allclose(out2, ref_f32, atol=5e-2, rtol=5e-2), \
        "mismatch vs f32 reference (2 tiles)"

    print("KERNEL_OK")
</pallas_src>

<mosaic_0001>
module attributes {stable_mosaic.version = 11 : i64} {
  func.func @_dqn_kernel(%arg0: i32, %arg1: memref<64x4xf32, #tpu.memory_space<vmem>>, %arg2: memref<3x128x128xbf16, #tpu.memory_space<vmem>>, %arg3: memref<3x1x128xf32, #tpu.memory_space<vmem>>, %arg4: memref<64x2xf32, #tpu.memory_space<vmem>>) attributes {dimension_semantics = [#tpu.dimension_semantics<parallel>], iteration_bounds = array<i64: 1>, scalar_prefetch = 0 : i64, scratch_operands = 0 : i64, tpu.core_type = #tpu.core_type<tc>, window_params = [{transform_indices = @transform_0, window_bounds = array<i64: 64, 4>}, {pipeline_mode = #tpu.pipeline_mode<synchronous>, transform_indices = @transform_1, window_bounds = array<i64: 3, 128, 128>}, {pipeline_mode = #tpu.pipeline_mode<synchronous>, transform_indices = @transform_2, window_bounds = array<i64: 3, 1, 128>}, {transform_indices = @transform_3, window_bounds = array<i64: 64, 2>}]} {
    %c0 = arith.constant 0 : index
    %c0_0 = arith.constant 0 : index
    %0 = vector.load %arg1[%c0, %c0_0] : memref<64x4xf32, #tpu.memory_space<vmem>>, vector<64x4xf32>
    %c0_1 = arith.constant 0 : index
    %c0_2 = arith.constant 0 : index
    %c0_3 = arith.constant 0 : index
    %1 = vector.load %arg2[%c0_1, %c0_2, %c0_3] : memref<3x128x128xbf16, #tpu.memory_space<vmem>>, vector<1x128x128xbf16>
    %2 = vector.shape_cast %1 : vector<1x128x128xbf16> to vector<128x128xbf16>
    %3 = arith.extf %2 : vector<128x128xbf16> to vector<128x128xf32>
    %c0_4 = arith.constant 0 : index
    %c0_5 = arith.constant 0 : index
    %c0_6 = arith.constant 0 : index
    %4 = vector.load %arg3[%c0_4, %c0_5, %c0_6] : memref<3x1x128xf32, #tpu.memory_space<vmem>>, vector<1x1x128xf32>
    %5 = vector.shape_cast %4 : vector<1x1x128xf32> to vector<1x128xf32>
    %6 = vector.extract_strided_slice %0 {offsets = [0, 0], sizes = [64, 1], strides = [1, 1]} : vector<64x4xf32> to vector<64x1xf32>
    %7 = vector.extract_strided_slice %3 {offsets = [0, 0], sizes = [1, 128], strides = [1, 1]} : vector<128x128xf32> to vector<1x128xf32>
    %8 = vector.broadcast %6 : vector<64x1xf32> to vector<64x128xf32>
    %9 = vector.broadcast %7 : vector<1x128xf32> to vector<64x128xf32>
    %10 = arith.mulf %8, %9 : vector<64x128xf32>
    %11 = vector.broadcast %5 : vector<1x128xf32> to vector<64x128xf32>
    %12 = arith.addf %11, %10 : vector<64x128xf32>
    %13 = vector.extract_strided_slice %0 {offsets = [0, 1], sizes = [64, 1], strides = [1, 1]} : vector<64x4xf32> to vector<64x1xf32>
    %14 = vector.extract_strided_slice %3 {offsets = [1, 0], sizes = [1, 128], strides = [1, 1]} : vector<128x128xf32> to vector<1x128xf32>
    %15 = vector.broadcast %13 : vector<64x1xf32> to vector<64x128xf32>
    %16 = vector.broadcast %14 : vector<1x128xf32> to vector<64x128xf32>
    %17 = arith.mulf %15, %16 : vector<64x128xf32>
    %18 = arith.addf %12, %17 : vector<64x128xf32>
    %19 = vector.extract_strided_slice %0 {offsets = [0, 2], sizes = [64, 1], strides = [1, 1]} : vector<64x4xf32> to vector<64x1xf32>
    %20 = vector.extract_strided_slice %3 {offsets = [2, 0], sizes = [1, 128], strides = [1, 1]} : vector<128x128xf32> to vector<1x128xf32>
    %21 = vector.broadcast %19 : vector<64x1xf32> to vector<64x128xf32>
    %22 = vector.broadcast %20 : vector<1x128xf32> to vector<64x128xf32>
    %23 = arith.mulf %21, %22 : vector<64x128xf32>
    %24 = arith.addf %18, %23 : vector<64x128xf32>
    %25 = vector.extract_strided_slice %0 {offsets = [0, 3], sizes = [64, 1], strides = [1, 1]} : vector<64x4xf32> to vector<64x1xf32>
    %26 = vector.extract_strided_slice %3 {offsets = [3, 0], sizes = [1, 128], strides = [1, 1]} : vector<128x128xf32> to vector<1x128xf32>
    %27 = vector.broadcast %25 : vector<64x1xf32> to vector<64x128xf32>
    %28 = vector.broadcast %26 : vector<1x128xf32> to vector<64x128xf32>
    %29 = arith.mulf %27, %28 : vector<64x128xf32>
    %30 = arith.addf %24, %29 : vector<64x128xf32>
    %cst = arith.constant 0.000000e+00 : f32
    %31 = vector.broadcast %cst : f32 to vector<64x128xf32>
    %32 = arith.maximumf %30, %31 : vector<64x128xf32>
    %33 = arith.truncf %32 : vector<64x128xf32> to vector<64x128xbf16>
    %c1 = arith.constant 1 : index
    %c0_7 = arith.constant 0 : index
    %c0_8 = arith.constant 0 : index
    %34 = vector.load %arg2[%c1, %c0_7, %c0_8] : memref<3x128x128xbf16, #tpu.memory_space<vmem>>, vector<1x128x128xbf16>
    %35 = vector.shape_cast %34 : vector<1x128x128xbf16> to vector<128x128xbf16>
    %cst_9 = arith.constant dense<0.000000e+00> : vector<64x128xf32>
    %36 = tpu.matmul %33, %35, %cst_9 {dimension_numbers = #tpu.dot_dimension_numbers<[1], [0], [0], [1], [0, 0, 1, 1], [], []>} : vector<64x128xbf16>, vector<128x128xbf16>, vector<64x128xf32> -> vector<64x128xf32>
    %c1_10 = arith.constant 1 : index
    %c0_11 = arith.constant 0 : index
    %c0_12 = arith.constant 0 : index
    %37 = vector.load %arg3[%c1_10, %c0_11, %c0_12] : memref<3x1x128xf32, #tpu.memory_space<vmem>>, vector<1x1x128xf32>
    %38 = vector.shape_cast %37 : vector<1x1x128xf32> to vector<1x128xf32>
    %39 = vector.broadcast %38 : vector<1x128xf32> to vector<64x128xf32>
    %40 = arith.addf %36, %39 : vector<64x128xf32>
    %cst_13 = arith.constant 0.000000e+00 : f32
    %41 = vector.broadcast %cst_13 : f32 to vector<64x128xf32>
    %42 = arith.maximumf %40, %41 : vector<64x128xf32>
    %43 = arith.truncf %42 : vector<64x128xf32> to vector<64x128xbf16>
    %c2 = arith.constant 2 : index
    %c0_14 = arith.constant 0 : index
    %c0_15 = arith.constant 0 : index
    %44 = vector.load %arg2[%c2, %c0_14, %c0_15] : memref<3x128x128xbf16, #tpu.memory_space<vmem>>, vector<1x128x128xbf16>
    %45 = vector.shape_cast %44 : vector<1x128x128xbf16> to vector<128x128xbf16>
    %cst_16 = arith.constant dense<0.000000e+00> : vector<64x128xf32>
    %46 = tpu.matmul %43, %45, %cst_16 {dimension_numbers = #tpu.dot_dimension_numbers<[1], [0], [0], [1], [0, 0, 1, 1], [], []>} : vector<64x128xbf16>, vector<128x128xbf16>, vector<64x128xf32> -> vector<64x128xf32>
    %c2_17 = arith.constant 2 : index
    %c0_18 = arith.constant 0 : index
    %c0_19 = arith.constant 0 : index
    %47 = vector.load %arg3[%c2_17, %c0_18, %c0_19] : memref<3x1x128xf32, #tpu.memory_space<vmem>>, vector<1x1x128xf32>
    %48 = vector.shape_cast %47 : vector<1x1x128xf32> to vector<1x128xf32>
    %49 = vector.broadcast %48 : vector<1x128xf32> to vector<64x128xf32>
    %50 = arith.addf %46, %49 : vector<64x128xf32>
    %51 = vector.extract_strided_slice %50 {offsets = [0, 0], sizes = [64, 2], strides = [1, 1]} : vector<64x128xf32> to vector<64x2xf32>
    %c0_20 = arith.constant 0 : index
    %c0_21 = arith.constant 0 : index
    %52 = vector.load %arg4[%c0_20, %c0_21] : memref<64x2xf32, #tpu.memory_space<vmem>>, vector<64x2xf32>
    tpu.vector_store %arg4[%c0_20, %c0_21], %51 {strides = array<i32>} : memref<64x2xf32, #tpu.memory_space<vmem>>, vector<64x2xf32>,
    return
  }
  func.func @transform_0(%arg0: i32) -> (i32, i32) {
    %c0_i32 = arith.constant 0 : i32
    %c0_i32_0 = arith.constant 0 : i32
    return %arg0, %c0_i32 : i32, i32
  }
  func.func @transform_1(%arg0: i32) -> (i32, i32, i32) {
    %c0_i32 = arith.constant 0 : i32
    %c0_i32_0 = arith.constant 0 : i32
    %c0_i32_1 = arith.constant 0 : i32
    %c0_i32_2 = arith.constant 0 : i32
    return %c0_i32, %c0_i32_0, %c0_i32_1 : i32, i32, i32
  }
  func.func @transform_2(%arg0: i32) -> (i32, i32, i32) {
    %c0_i32 = arith.constant 0 : i32
    %c0_i32_0 = arith.constant 0 : i32
    %c0_i32_1 = arith.constant 0 : i32
    %c0_i32_2 = arith.constant 0 : i32
    return %c0_i32, %c0_i32_0, %c0_i32_1 : i32, i32, i32
  }
  func.func @transform_3(%arg0: i32) -> (i32, i32) {
    %c0_i32 = arith.constant 0 : i32
    %c0_i32_0 = arith.constant 0 : i32
    return %arg0, %c0_i32 : i32, i32
  }
}

</mosaic_0001>

<llo_original>
// kernel: dqn_forward.1
$region0: #{dqn_forward.1}
  #allocation0 [shape = 'u32[]', space=smem, size = 0x4, offset = 0x4, fixed_abs, tag = 'smem constant byte address 0x4 - core index']
  #allocation1 [shape = 'u32[144,128]{1,0:T(1,128)}', space=vmem, size = 0x12000, scoped, tag = 'internal scratch']
  %s0 = inlined_call_operand.vmem [shape: f32[64,4], index: 0, kind: input, shape index: {}]
  %s1 = inlined_call_operand.hbm [shape: bf16[3,128,128], index: 1, kind: input, shape index: {}]
  %s2 = inlined_call_operand.vmem [shape: f32[3,1,128], index: 2, kind: input, shape index: {}]
  %s3 = inlined_call_operand.vmem [shape: f32[64,2], index: 3, kind: output, shape index: {}]
  %s4 = sld [smem:[#allocation0]]
  $region26: #{dqn_forward.1} parent=0
    _
  %s6 = ssub.s32 1, %s4
  %s7 = scalar_select 0, %s6, %s4
  $region1: #{dqn_forward.1} parent=0
    #allocation2 [shape = 'u8[98304]{0}', space=vmem, size = 0x18000, scoped, tag = 'input window, operand 1, single buffered']
    #allocation3 [shape = 's32[1]{0}', space=sflag, size = 0x4, scoped, tag = 'scoped memory for dqn_forward.1']
    %8 = vsyncpa [#allocation3], 0
    // Predicated region
    $region2: #{dqn_forward.1} parent=1 // pred_check
      _
    $region3: #{dqn_forward.1} parent=1 // pred_check_branch
      %10 = sbr.rel (0) target = $region5
    $region4: #{dqn_forward.1} parent=1 // pred_region
      _
    $region5: #{dqn_forward.1} parent=1 // pred_fallthru
      _
    // Predicated region
    $region6: #{dqn_forward.1} parent=1 // pred_check
      _
    $region7: #{dqn_forward.1} parent=1 // pred_check_branch
      %12 = sbr.rel (0) target = $region9
    $region8: #{dqn_forward.1} parent=1 // pred_region
      %s14 = ssub.s32 3072, 3072
      %15 = vsyncadd [#allocation3], %s14
      %s16 = sshll.u32 [#allocation2], 4
      %s17 = int_to_ptr.vmem [resolvable:$true] %s16
      %22 = dma.hbm_to_vmem [thread:$0]  %s1, 3072, %s17, [#allocation3], 64, 64, 4
    $region9: #{dqn_forward.1} parent=1 // pred_fallthru
      _
    // Predicated region
    $region10: #{dqn_forward.1} parent=1 // pred_check
      _
    $region11: #{dqn_forward.1} parent=1 // pred_check_branch
      %24 = sbr.rel (0) target = $region13
    $region12: #{dqn_forward.1} parent=1 // pred_region
      _
    $region13: #{dqn_forward.1} parent=1 // pred_fallthru
      _
    // Predicated region
    $region14: #{dqn_forward.1} parent=1 // pred_check
      _
    $region15: #{dqn_forward.1} parent=1 // pred_check_branch
      %26 = sbr.rel (0) target = $region17
    $region16: #{dqn_forward.1} parent=1 // pred_region
      %27 = dma.done [#allocation3], 3072
    $region17: #{dqn_forward.1} parent=1 // pred_fallthru
      _
    %v29 = vld [vmem:[%s0] sm:$0xff]
    %v30 = vld [vmem:[%s0 + $0x8] sm:$0xff]
    %v31 = vld [vmem:[%s0 + $0x10] sm:$0xff]
    %v32 = vld [vmem:[%s0 + $0x18] sm:$0xff]
    %v33 = vld [vmem:[%s0 + $0x20] sm:$0xff]
    %v34 = vld [vmem:[%s0 + $0x28] sm:$0xff]
    %v35 = vld [vmem:[%s0 + $0x30] sm:$0xff]
    %v36 = vld [vmem:[%s0 + $0x38] sm:$0xff]
    %v37 = vld [vmem:[#allocation2] sm:$0xf]
    %v38 = vunpack.c.l.bf16 %v37
    %v39 = vld [vmem:[%s2] sm:$0x1]
    %41 = vset.pattern.permute.xlu0 0
    %42 = vperm.xlu0 %41, %v29
    %v43 = vpop.permute.xlu0 %42
    %46 = vset.pattern.permute.xlu0 0
    %47 = vperm.xlu0 %46, %v30
    %v48 = vpop.permute.xlu0 %47
    %51 = vset.pattern.permute.xlu0 0
    %52 = vperm.xlu0 %51, %v31
    %v53 = vpop.permute.xlu0 %52
    %56 = vset.pattern.permute.xlu0 0
    %57 = vperm.xlu0 %56, %v32
    %v58 = vpop.permute.xlu0 %57
    %61 = vset.pattern.permute.xlu0 0
    %62 = vperm.xlu0 %61, %v33
    %v63 = vpop.permute.xlu0 %62
    %66 = vset.pattern.permute.xlu0 0
    %67 = vperm.xlu0 %66, %v34
    %v68 = vpop.permute.xlu0 %67
    %71 = vset.pattern.permute.xlu0 0
    %72 = vperm.xlu0 %71, %v35
    %v73 = vpop.permute.xlu0 %72
    %76 = vset.pattern.permute.xlu0 0
    %77 = vperm.xlu0 %76, %v36
    %v78 = vpop.permute.xlu0 %77
    %v80 = vlaneseq
    %v81 = vshrl.u32 %v80, 7
    %v82 = vsub.s32 0, %v81
    %v83 = vrot.slane %v38, %v82
    %v84 = vmul.f32 %v43, %v83
    %v85 = vmul.f32 %v48, %v83
    %v86 = vmul.f32 %v53, %v83
    %v87 = vmul.f32 %v58, %v83
    %v88 = vmul.f32 %v63, %v83
    %v89 = vmul.f32 %v68, %v83
    %v90 = vmul.f32 %v73, %v83
    %v91 = vmul.f32 %v78, %v83
    %v93 = vlaneseq
    %v94 = vshrl.u32 %v93, 7
    %v95 = vsub.s32 0, %v94
    %v96 = vrot.slane %v39, %v95
    %v98 = vadd.f32 %v96, %v84
    %v99 = vadd.f32 %v96, %v85
    %v100 = vadd.f32 %v96, %v86
    %v101 = vadd.f32 %v96, %v87
    %v102 = vadd.f32 %v96, %v88
    %v103 = vadd.f32 %v96, %v89
    %v104 = vadd.f32 %v96, %v90
    %v105 = vadd.f32 %v96, %v91
    %106 = vset.pattern.permute.xlu0 1
    %107 = vperm.xlu0 %106, %v29
    %v108 = vpop.permute.xlu0 %107
    %110 = vset.pattern.permute.xlu0 1
    %111 = vperm.xlu0 %110, %v30
    %v112 = vpop.permute.xlu0 %111
    %114 = vset.pattern.permute.xlu0 1
    %115 = vperm.xlu0 %114, %v31
    %v116 = vpop.permute.xlu0 %115
    %118 = vset.pattern.permute.xlu0 1
    %119 = vperm.xlu0 %118, %v32
    %v120 = vpop.permute.xlu0 %119
    %122 = vset.pattern.permute.xlu0 1
    %123 = vperm.xlu0 %122, %v33
    %v124 = vpop.permute.xlu0 %123
    %126 = vset.pattern.permute.xlu0 1
    %127 = vperm.xlu0 %126, %v34
    %v128 = vpop.permute.xlu0 %127
    %130 = vset.pattern.permute.xlu0 1
    %131 = vperm.xlu0 %130, %v35
    %v132 = vpop.permute.xlu0 %131
    %134 = vset.pattern.permute.xlu0 1
    %135 = vperm.xlu0 %134, %v36
    %v136 = vpop.permute.xlu0 %135
    %v138 = vlaneseq
    %v139 = vshrl.u32 %v138, 7
    %v140 = vsub.s32 1, %v139
    %v141 = vrot.slane %v38, %v140
    %v142 = vmul.f32 %v108, %v141
    %v143 = vmul.f32 %v112, %v141
    %v144 = vmul.f32 %v116, %v141
    %v145 = vmul.f32 %v120, %v141
    %v146 = vmul.f32 %v124, %v141
    %v147 = vmul.f32 %v128, %v141
    %v148 = vmul.f32 %v132, %v141
    %v149 = vmul.f32 %v136, %v141
    %v150 = vadd.f32 %v98, %v142
    %v151 = vadd.f32 %v99, %v143
    %v152 = vadd.f32 %v100, %v144
    %v153 = vadd.f32 %v101, %v145
    %v154 = vadd.f32 %v102, %v146
    %v155 = vadd.f32 %v103, %v147
    %v156 = vadd.f32 %v104, %v148
    %v157 = vadd.f32 %v105, %v149
    %158 = vset.pattern.permute.xlu0 2
    %159 = vperm.xlu0 %158, %v29
    %v160 = vpop.permute.xlu0 %159
    %162 = vset.pattern.permute.xlu0 2
    %163 = vperm.xlu0 %162, %v30
    %v164 = vpop.permute.xlu0 %163
    %166 = vset.pattern.permute.xlu0 2
    %167 = vperm.xlu0 %166, %v31
    %v168 = vpop.permute.xlu0 %167
    %170 = vset.pattern.permute.xlu0 2
    %171 = vperm.xlu0 %170, %v32
    %v172 = vpop.permute.xlu0 %171
    %174 = vset.pattern.permute.xlu0 2
    %175 = vperm.xlu0 %174, %v33
    %v176 = vpop.permute.xlu0 %175
    %178 = vset.pattern.permute.xlu0 2
    %179 = vperm.xlu0 %178, %v34
    %v180 = vpop.permute.xlu0 %179
    %182 = vset.pattern.permute.xlu0 2
    %183 = vperm.xlu0 %182, %v35
    %v184 = vpop.permute.xlu0 %183
    %186 = vset.pattern.permute.xlu0 2
    %187 = vperm.xlu0 %186, %v36
    %v188 = vpop.permute.xlu0 %187
    %v190 = vlaneseq
    %v191 = vshrl.u32 %v190, 7
    %v192 = vsub.s32 2, %v191
    %v193 = vrot.slane %v38, %v192
    %v194 = vmul.f32 %v160, %v193
    %v195 = vmul.f32 %v164, %v193
    %v196 = vmul.f32 %v168, %v193
    %v197 = vmul.f32 %v172, %v193
    %v198 = vmul.f32 %v176, %v193
    %v199 = vmul.f32 %v180, %v193
    %v200 = vmul.f32 %v184, %v193
    %v201 = vmul.f32 %v188, %v193
    %v202 = vadd.f32 %v150, %v194
    %v203 = vadd.f32 %v151, %v195
    %v204 = vadd.f32 %v152, %v196
    %v205 = vadd.f32 %v153, %v197
    %v206 = vadd.f32 %v154, %v198
    %v207 = vadd.f32 %v155, %v199
    %v208 = vadd.f32 %v156, %v200
    %v209 = vadd.f32 %v157, %v201
    %210 = vset.pattern.permute.xlu0 3
    %211 = vperm.xlu0 %210, %v29
    %v212 = vpop.permute.xlu0 %211
    %214 = vset.pattern.permute.xlu0 3
    %215 = vperm.xlu0 %214, %v30
    %v216 = vpop.permute.xlu0 %215
    %218 = vset.pattern.permute.xlu0 3
    %219 = vperm.xlu0 %218, %v31
    %v220 = vpop.permute.xlu0 %219
    %222 = vset.pattern.permute.xlu0 3
    %223 = vperm.xlu0 %222, %v32
    %v224 = vpop.permute.xlu0 %223
    %226 = vset.pattern.permute.xlu0 3
    %227 = vperm.xlu0 %226, %v33
    %v228 = vpop.permute.xlu0 %227
    %230 = vset.pattern.permute.xlu0 3
    %231 = vperm.xlu0 %230, %v34
    %v232 = vpop.permute.xlu0 %231
    %234 = vset.pattern.permute.xlu0 3
    %235 = vperm.xlu0 %234, %v35
    %v236 = vpop.permute.xlu0 %235
    %238 = vset.pattern.permute.xlu0 3
    %239 = vperm.xlu0 %238, %v36
    %v240 = vpop.permute.xlu0 %239
    %v242 = vlaneseq
    %v243 = vshrl.u32 %v242, 7
    %v244 = vsub.s32 3, %v243
    %v245 = vrot.slane %v38, %v244
    %v246 = vmul.f32 %v212, %v245
    %v247 = vmul.f32 %v216, %v245
    %v248 = vmul.f32 %v220, %v245
    %v249 = vmul.f32 %v224, %v245
    %v250 = vmul.f32 %v228, %v245
    %v251 = vmul.f32 %v232, %v245
    %v252 = vmul.f32 %v236, %v245
    %v253 = vmul.f32 %v240, %v245
    %v254 = vadd.f32 %v202, %v246
    %v255 = vadd.f32 %v203, %v247
    %v256 = vadd.f32 %v204, %v248
    %v257 = vadd.f32 %v205, %v249
    %v258 = vadd.f32 %v206, %v250
    %v259 = vadd.f32 %v207, %v251
    %v260 = vadd.f32 %v208, %v252
    %v261 = vadd.f32 %v209, %v253
    %v262 = vmax.f32 %v254, 0.0
    %v263 = vmax.f32 %v255, 0.0
    %v264 = vmax.f32 %v256, 0.0
    %v265 = vmax.f32 %v257, 0.0
    %v266 = vmax.f32 %v258, 0.0
    %v267 = vmax.f32 %v259, 0.0
    %v268 = vmax.f32 %v260, 0.0
    %v269 = vmax.f32 %v261, 0.0
    %v270 = vpack.c.bf16 %v263, %v262
    %v271 = vpack.c.bf16 %v265, %v264
    %v272 = vpack.c.bf16 %v267, %v266
    %v273 = vpack.c.bf16 %v269, %v268
    %s274 = scalar_lea.vmem [#allocation2], 64
    %v275 = vld [vmem:[%s274] sm:$0xf]
    %v276 = vld [vmem:[%s274 + $0x4] sm:$0xf]
    %v277 = vld [vmem:[%s274 + $0x8] sm:$0xf]
    %v278 = vld [vmem:[%s274 + $0xc] sm:$0xf]
    %v279 = vld [vmem:[%s274 + $0x10] sm:$0xf]
    %v280 = vld [vmem:[%s274 + $0x14] sm:$0xf]
    %v281 = vld [vmem:[%s274 + $0x18] sm:$0xf]
    %v282 = vld [vmem:[%s274 + $0x1c] sm:$0xf]
    %v283 = vld [vmem:[%s274 + $0x20] sm:$0xf]
    %v284 = vld [vmem:[%s274 + $0x24] sm:$0xf]
    %v285 = vld [vmem:[%s274 + $0x28] sm:$0xf]
    %v286 = vld [vmem:[%s274 + $0x2c] sm:$0xf]
    %v287 = vld [vmem:[%s274 + $0x30] sm:$0xf]
    %v288 = vld [vmem:[%s274 + $0x34] sm:$0xf]
    %v289 = vld [vmem:[%s274 + $0x38] sm:$0xf]
    %v290 = vld [vmem:[%s274 + $0x3c] sm:$0xf]
    %s291 = scalar_lea.vmem %s2, 1
    %v292 = vld [vmem:[%s291] sm:$0x1]
    %v294 = vlaneseq
    %v295 = vshrl.u32 %v294, 7
    %v296 = vsub.s32 0, %v295
    %v297 = vrot.slane %v292, %v296
    %v315 = vunpack.c.l.b16 %v275
    %v316 = vunpack.c.l.b16 %v276
    %v317 = vunpack.c.l.b16 %v277
    %v318 = vunpack.c.l.b16 %v278
    %v319 = vunpack.c.l.b16 %v279
    %v320 = vunpack.c.l.b16 %v280
    %v321 = vunpack.c.l.b16 %v281
    %v322 = vunpack.c.l.b16 %v282
    %v323 = vunpack.c.l.b16 %v283
    %v324 = vunpack.c.l.b16 %v284
    %v325 = vunpack.c.l.b16 %v285
    %v326 = vunpack.c.l.b16 %v286
    %v327 = vunpack.c.l.b16 %v287
    %v328 = vunpack.c.l.b16 %v288
    %v329 = vunpack.c.l.b16 %v289
    %v330 = vunpack.c.l.b16 %v290
    %v331 = vpack.c.b16 %v316, %v315
    %v332 = vpack.c.b16 %v318, %v317
    %v333 = vpack.c.b16 %v320, %v319
    %v334 = vpack.c.b16 %v322, %v321
    %v335 = vpack.c.b16 %v324, %v323
    %v336 = vpack.c.b16 %v326, %v325
    %v337 = vpack.c.b16 %v328, %v327
    %v338 = vpack.c.b16 %v330, %v329
    %347 = vmatprep.subr.bf16.mxu0 0
    %348 = vmatpush1.bf16.msra.mxu0 %v331
    %349 = vmatprep.subr.bf16.mxu0 0
    %350 = vmatpush1.bf16.msra.mxu0 %v332
    %351 = vmatprep.subr.bf16.mxu0 0
    %352 = vmatpush1.bf16.msra.mxu0 %v333
    %353 = vmatprep.subr.bf16.mxu0 0
    %354 = vmatpush1.bf16.msra.mxu0 %v334
    %355 = vmatprep.subr.bf16.mxu0 0
    %356 = vmatpush1.bf16.msra.mxu0 %v335
    %357 = vmatprep.subr.bf16.mxu0 0
    %358 = vmatpush1.bf16.msra.mxu0 %v336
    %359 = vmatprep.subr.bf16.mxu0 0
    %360 = vmatpush1.bf16.msra.mxu0 %v337
    %361 = vmatprep.subr.bf16.mxu0 0
    %362 = vmatpush1.bf16.msra.mxu0 %v338
    %363 = vmatprep.subr.bf16.mxu0 0
    %364 = vmatpush1.bf16.msra.mxu0 0
    %365 = vmatprep.subr.bf16.mxu0 0
    %366 = vmatpush1.bf16.msra.mxu0 0
    %367 = vmatprep.subr.bf16.mxu0 0
    %368 = vmatpush1.bf16.msra.mxu0 0
    %369 = vmatprep.subr.bf16.mxu0 0
    %370 = vmatpush1.bf16.msra.mxu0 0
    %371 = vmatprep.subr.bf16.mxu0 0
    %372 = vmatpush1.bf16.msra.mxu0 0
    %373 = vmatprep.subr.bf16.mxu0 0
    %374 = vmatpush1.bf16.msra.mxu0 0
    %375 = vmatprep.subr.bf16.mxu0 0
    %376 = vmatpush1.bf16.msra.mxu0 0
    %377 = vmatprep.subr.bf16.mxu0 0
    %378 = vmatpush1.bf16.msra.mxu0 0
    %379 = vmatprep.mubr.bf16.mxu0 0
    %380 = vmatmul.mubr.bf16.gmra.mrb[0].mxu0 %v270
    %v381 = vpop.f32.mrb[0].mxu0
    %v382 = vadd.f32 %v297, %v381
    %v383 = vpop.f32.mrb[0].mxu0
    %v384 = vpop.f32.mrb[0].mxu0
    %v385 = vadd.f32 %v297, %v384
    %v386 = vpop.f32.mrb[0].mxu0
    %387 = vmatprep.mubr.bf16.mxu0 0
    %388 = vmatmul.mubr.bf16.gmra.mrb[0].mxu0 %v271
    %v389 = vpop.f32.mrb[0].mxu0
    %v390 = vadd.f32 %v297, %v389
    %v391 = vpop.f32.mrb[0].mxu0
    %v392 = vpop.f32.mrb[0].mxu0
    %v393 = vadd.f32 %v297, %v392
    %v394 = vpop.f32.mrb[0].mxu0
    %395 = vmatprep.mubr.bf16.mxu0 0
    %396 = vmatmul.mubr.bf16.gmra.mrb[0].mxu0 %v272
    %v397 = vpop.f32.mrb[0].mxu0
    %v398 = vadd.f32 %v297, %v397
    %v399 = vpop.f32.mrb[0].mxu0
    %v400 = vpop.f32.mrb[0].mxu0
    %v401 = vadd.f32 %v297, %v400
    %v402 = vpop.f32.mrb[0].mxu0
    %403 = vmatprep.mubr.bf16.mxu0 0
    %404 = vmatmul.mubr.bf16.gmra.mrb[0].mxu0 %v273
    %v405 = vpop.f32.mrb[0].mxu0
    %v406 = vadd.f32 %v297, %v405
    %v407 = vpop.f32.mrb[0].mxu0
    %v408 = vpop.f32.mrb[0].mxu0
    %v409 = vadd.f32 %v297, %v408
    %v410 = vpop.f32.mrb[0].mxu0
    %411 = vdwg.mxu0
    %v412 = vmax.f32 %v382, 0.0
    %v413 = vmax.f32 %v385, 0.0
    %v414 = vmax.f32 %v390, 0.0
    %v415 = vmax.f32 %v393, 0.0
    %v416 = vmax.f32 %v398, 0.0
    %v417 = vmax.f32 %v401, 0.0
    %v418 = vmax.f32 %v406, 0.0
    %v419 = vmax.f32 %v409, 0.0
    %v420 = vpack.c.bf16 %v413, %v412
    %v421 = vpack.c.bf16 %v415, %v414
    %v422 = vpack.c.bf16 %v417, %v416
    %v423 = vpack.c.bf16 %v419, %v418
    %s424 = scalar_lea.vmem [#allocation2], 128
    %v425 = vld [vmem:[%s424] sm:$0xf]
    %v426 = vld [vmem:[%s424 + $0x4] sm:$0xf]
    %v427 = vld [vmem:[%s424 + $0x8] sm:$0xf]
    %v428 = vld [vmem:[%s424 + $0xc] sm:$0xf]
    %v429 = vld [vmem:[%s424 + $0x10] sm:$0xf]
    %v430 = vld [vmem:[%s424 + $0x14] sm:$0xf]
    %v431 = vld [vmem:[%s424 + $0x18] sm:$0xf]
    %v432 = vld [vmem:[%s424 + $0x1c] sm:$0xf]
    %v433 = vld [vmem:[%s424 + $0x20] sm:$0xf]
    %v434 = vld [vmem:[%s424 + $0x24] sm:$0xf]
    %v435 = vld [vmem:[%s424 + $0x28] sm:$0xf]
    %v436 = vld [vmem:[%s424 + $0x2c] sm:$0xf]
    %v437 = vld [vmem:[%s424 + $0x30] sm:$0xf]
    %v438 = vld [vmem:[%s424 + $0x34] sm:$0xf]
    %v439 = vld [vmem:[%s424 + $0x38] sm:$0xf]
    %v440 = vld [vmem:[%s424 + $0x3c] sm:$0xf]
    %s441 = scalar_lea.vmem %s2, 2
    %v442 = vld [vmem:[%s441] sm:$0x1]
    %v444 = vlaneseq
    %v445 = vshrl.u32 %v444, 7
    %v446 = vsub.s32 0, %v445
    %v447 = vrot.slane %v442, %v446
    %v465 = vunpack.c.l.b16 %v425
    %v466 = vunpack.c.l.b16 %v426
    %v467 = vunpack.c.l.b16 %v427
    %v468 = vunpack.c.l.b16 %v428
    %v469 = vunpack.c.l.b16 %v429
    %v470 = vunpack.c.l.b16 %v430
    %v471 = vunpack.c.l.b16 %v431
    %v472 = vunpack.c.l.b16 %v432
    %v473 = vunpack.c.l.b16 %v433
    %v474 = vunpack.c.l.b16 %v434
    %v475 = vunpack.c.l.b16 %v435
    %v476 = vunpack.c.l.b16 %v436
    %v477 = vunpack.c.l.b16 %v437
    %v478 = vunpack.c.l.b16 %v438
    %v479 = vunpack.c.l.b16 %v439
    %v480 = vunpack.c.l.b16 %v440
    %v481 = vpack.c.b16 %v466, %v465
    %v482 = vpack.c.b16 %v468, %v467
    %v483 = vpack.c.b16 %v470, %v469
    %v484 = vpack.c.b16 %v472, %v471
    %v485 = vpack.c.b16 %v474, %v473
    %v486 = vpack.c.b16 %v476, %v475
    %v487 = vpack.c.b16 %v478, %v477
    %v488 = vpack.c.b16 %v480, %v479
    %497 = vmatprep.subr.bf16.mxu0 0
    %498 = vmatpush1.bf16.msra.mxu0 %v481
    %499 = vmatprep.subr.bf16.mxu0 0
    %500 = vmatpush1.bf16.msra.mxu0 %v482
    %501 = vmatprep.subr.bf16.mxu0 0
    %502 = vmatpush1.bf16.msra.mxu0 %v483
    %503 = vmatprep.subr.bf16.mxu0 0
    %504 = vmatpush1.bf16.msra.mxu0 %v484
    %505 = vmatprep.subr.bf16.mxu0 0
    %506 = vmatpush1.bf16.msra.mxu0 %v485
    %507 = vmatprep.subr.bf16.mxu0 0
    %508 = vmatpush1.bf16.msra.mxu0 %v486
    %509 = vmatprep.subr.bf16.mxu0 0
    %510 = vmatpush1.bf16.msra.mxu0 %v487
    %511 = vmatprep.subr.bf16.mxu0 0
    %512 = vmatpush1.bf16.msra.mxu0 %v488
    %513 = vmatprep.subr.bf16.mxu0 0
    %514 = vmatpush1.bf16.msra.mxu0 0
    %515 = vmatprep.subr.bf16.mxu0 0
    %516 = vmatpush1.bf16.msra.mxu0 0
    %517 = vmatprep.subr.bf16.mxu0 0
    %518 = vmatpush1.bf16.msra.mxu0 0
    %519 = vmatprep.subr.bf16.mxu0 0
    %520 = vmatpush1.bf16.msra.mxu0 0
    %521 = vmatprep.subr.bf16.mxu0 0
    %522 = vmatpush1.bf16.msra.mxu0 0
    %523 = vmatprep.subr.bf16.mxu0 0
    %524 = vmatpush1.bf16.msra.mxu0 0
    %525 = vmatprep.subr.bf16.mxu0 0
    %526 = vmatpush1.bf16.msra.mxu0 0
    %527 = vmatprep.subr.bf16.mxu0 0
    %528 = vmatpush1.bf16.msra.mxu0 0
    %529 = vmatprep.mubr.bf16.mxu0 0
    %530 = vmatmul.mubr.bf16.gmra.mrb[0].mxu0 %v420
    %v531 = vpop.f32.mrb[0].mxu0
    %v532 = vadd.f32 %v447, %v531
    %v533 = vpop.f32.mrb[0].mxu0
    %v534 = vpop.f32.mrb[0].mxu0
    %v535 = vadd.f32 %v447, %v534
    %v536 = vpop.f32.mrb[0].mxu0
    %537 = vmatprep.mubr.bf16.mxu0 0
    %538 = vmatmul.mubr.bf16.gmra.mrb[0].mxu0 %v421
    %v539 = vpop.f32.mrb[0].mxu0
    %v540 = vadd.f32 %v447, %v539
    %v541 = vpop.f32.mrb[0].mxu0
    %v542 = vpop.f32.mrb[0].mxu0
    %v543 = vadd.f32 %v447, %v542
    %v544 = vpop.f32.mrb[0].mxu0
    %545 = vmatprep.mubr.bf16.mxu0 0
    %546 = vmatmul.mubr.bf16.gmra.mrb[0].mxu0 %v422
    %v547 = vpop.f32.mrb[0].mxu0
    %v548 = vadd.f32 %v447, %v547
    %v549 = vpop.f32.mrb[0].mxu0
    %v550 = vpop.f32.mrb[0].mxu0
    %v551 = vadd.f32 %v447, %v550
    %v552 = vpop.f32.mrb[0].mxu0
    %553 = vmatprep.mubr.bf16.mxu0 0
    %554 = vmatmul.mubr.bf16.gmra.mrb[0].mxu0 %v423
    %v555 = vpop.f32.mrb[0].mxu0
    %v556 = vadd.f32 %v447, %v555
    %v557 = vpop.f32.mrb[0].mxu0
    %v558 = vpop.f32.mrb[0].mxu0
    %v559 = vadd.f32 %v447, %v558
    %v560 = vpop.f32.mrb[0].mxu0
    %561 = vdwg.mxu0
    %vm562 = vcmask 15360
    %563 = vst.msk [vmem:[%s3] sm:$0xff] %vm562, %v532
    %564 = vst.msk [vmem:[%s3 + $0x8] sm:$0xff] %vm562, %v535
    %565 = vst.msk [vmem:[%s3 + $0x10] sm:$0xff] %vm562, %v540
    %566 = vst.msk [vmem:[%s3 + $0x18] sm:$0xff] %vm562, %v543
    %567 = vst.msk [vmem:[%s3 + $0x20] sm:$0xff] %vm562, %v548
    %568 = vst.msk [vmem:[%s3 + $0x28] sm:$0xff] %vm562, %v551
    %569 = vst.msk [vmem:[%s3 + $0x30] sm:$0xff] %vm562, %v556
    %570 = vst.msk [vmem:[%s3 + $0x38] sm:$0xff] %vm562, %v559
    // Predicated region
    $region18: #{dqn_forward.1} parent=1 // pred_check
      _
    $region19: #{dqn_forward.1} parent=1 // pred_check_branch
      %572 = sbr.rel (0) target = $region21
    $region20: #{dqn_forward.1} parent=1 // pred_region
      _
    $region21: #{dqn_forward.1} parent=1 // pred_fallthru
      _
    // Predicated region
    $region22: #{dqn_forward.1} parent=1 // pred_check
      _
    $region23: #{dqn_forward.1} parent=1 // pred_check_branch
      %574 = sbr.rel (0) target = $region25
    $region24: #{dqn_forward.1} parent=1 // pred_region
      _
    $region25: #{dqn_forward.1} parent=1 // pred_fallthru
      _
    %575 = vsyncpa [#allocation3], 1

</llo_original>
